<compile_context>
chip_gen: v7x
topology: tpu7x:2x2x1
jax: 0.10.0
libtpu: 0.0.40
codegen_flags: <defaults>
</compile_context>

<pallas_src>
import jax
import jax.numpy as jnp
from jax.experimental import pallas as pl
from jax.experimental.pallas import tpu as pltpu


def _bn_noop_kernel(x_ref, scale_ref, shift_ref, o_ref):
    # (x + 0) followed by eval-mode BN, fused into one FMA.
    # The "+ 0" is a semantic no-op for the fused result and is dropped.
    x = x_ref[...].astype(jnp.float32)
    y = x * scale_ref[...] + shift_ref[...]
    o_ref[...] = y.astype(o_ref.dtype)


def _round_up(v, m):
    return -(-v // m) * m


def _choose_row_tile(num_rows, lane_dim, itemsize, row_align,
                     target_bytes=2 << 20, min_steps=8):
    """Rows per tile: ~target_bytes per x-tile, >= min_steps grid steps when
    the activation is large enough, aligned to the packed sublane tile."""
    row_bytes = max(1, lane_dim * itemsize)
    rows_by_bytes = max(row_align, (target_bytes // row_bytes) // row_align * row_align)
    rows_by_steps = max(row_align, _round_up(pl.cdiv(num_rows, min_steps), row_align))
    return max(row_align, min(rows_by_bytes, rows_by_steps))


def add_noop_bn_forward(x_nchw, gamma, beta, running_mean, running_var, eps=1e-5):
    """x_nchw: (N, C, H, W). gamma/beta/mean/var: (C,). Returns x's dtype."""
    N, C, H, W = x_nchw.shape
    R = N * C
    L = H * W
    x_dtype = x_nchw.dtype

    # Fold the 4 BN parameters into scale/shift (O(C) work, done once in JAX).
    var = running_var.astype(jnp.float32)
    scale_c = gamma.astype(jnp.float32) * jax.lax.rsqrt(var + jnp.float32(eps))
    shift_c = beta.astype(jnp.float32) - running_mean.astype(jnp.float32) * scale_c

    # Lane-dense view: (N*C, H*W).  Contiguous reshape, no copy, no cast.
    x2d = x_nchw.reshape(R, L)

    # Per-row (N*C, 1) parameter columns (broadcast over lanes in-kernel).
    scale2d = jnp.tile(scale_c.reshape(1, C), (N, 1)).reshape(R, 1)
    shift2d = jnp.tile(shift_c.reshape(1, C), (N, 1)).reshape(R, 1)

    itemsize = jnp.dtype(x_dtype).itemsize
    row_align = max(8, 32 // max(1, itemsize))  # 8 (f32) / 16 (bf16) / 32 (int8)
    TR = _choose_row_tile(R, L, itemsize, row_align)
    grid = (pl.cdiv(R, TR),)  # ragged last tile handled by Pallas masking

    spec_x = pl.BlockSpec((TR, L), lambda i: (i, 0))
    spec_p = pl.BlockSpec((TR, 1), lambda i: (i, 0))

    out2d = pl.pallas_call(
        _bn_noop_kernel,
        out_shape=jax.ShapeDtypeStruct((R, L), x_dtype),
        grid_spec=pltpu.PrefetchScalarGridSpec(
            num_scalar_prefetch=0,
            grid=grid,
            in_specs=[spec_x, spec_p, spec_p],
            out_specs=spec_x,
        ),
        compiler_params=pltpu.CompilerParams(
            dimension_semantics=("parallel",),
            vmem_limit_bytes=48 << 20,
        ),
    )(x2d, scale2d, shift2d)

    return out2d.reshape(N, C, H, W)


if __name__ == "__main__":
    key = jax.random.PRNGKey(0)
    N, C, H, W = 2, 4, 16, 16

    x = jax.random.normal(key, (N, C, H, W), dtype=jnp.float32)

    # Deterministic "BatchNorm2d" parameters (synthetic, not a checkpoint).
    gamma = jnp.linspace(0.5, 1.5, C, dtype=jnp.float32)
    beta = jnp.linspace(-0.2, 0.2, C, dtype=jnp.float32)
    running_mean = jnp.linspace(-0.1, 0.1, C, dtype=jnp.float32)
    running_var = jnp.linspace(0.8, 1.2, C, dtype=jnp.float32)
    eps = 1e-5

    out = add_noop_bn_forward(x, gamma, beta, running_mean, running_var, eps)
    out = jax.block_until_ready(out)

    # Pure-JAX reference of the same semantics: (x + 0) -> BN(eval).
    ref = (x + 0.0 - running_mean[None, :, None, None]) / jnp.sqrt(
        running_var[None, :, None, None] + eps
    ) * gamma[None, :, None, None] + beta[None, :, None, None]

    assert out.shape == (N, C, H, W)
    assert out.dtype == x.dtype
    assert jnp.allclose(out, ref, atol=1e-5, rtol=1e-5)

    print("KERNEL_OK")
</pallas_src>

<mosaic_0001>
module attributes {stable_mosaic.version = 11 : i64} {
  func.func @_bn_noop_kernel(%arg0: i32, %arg1: memref<8x256xf32, #tpu.memory_space<vmem>>, %arg2: memref<8x1xf32, #tpu.memory_space<vmem>>, %arg3: memref<8x1xf32, #tpu.memory_space<vmem>>, %arg4: memref<8x256xf32, #tpu.memory_space<vmem>>) attributes {dimension_semantics = [#tpu.dimension_semantics<parallel>], iteration_bounds = array<i64: 1>, scalar_prefetch = 0 : i64, scratch_operands = 0 : i64, tpu.core_type = #tpu.core_type<tc>, window_params = [{transform_indices = @transform_0, window_bounds = array<i64: 8, 256>}, {transform_indices = @transform_1, window_bounds = array<i64: 8, 1>}, {transform_indices = @transform_2, window_bounds = array<i64: 8, 1>}, {transform_indices = @transform_3, window_bounds = array<i64: 8, 256>}]} {
    %c0 = arith.constant 0 : index
    %c0_0 = arith.constant 0 : index
    %0 = vector.load %arg1[%c0, %c0_0] : memref<8x256xf32, #tpu.memory_space<vmem>>, vector<8x256xf32>
    %c0_1 = arith.constant 0 : index
    %c0_2 = arith.constant 0 : index
    %1 = vector.load %arg2[%c0_1, %c0_2] : memref<8x1xf32, #tpu.memory_space<vmem>>, vector<8x1xf32>
    %2 = vector.broadcast %1 : vector<8x1xf32> to vector<8x256xf32>
    %3 = arith.mulf %0, %2 : vector<8x256xf32>
    %c0_3 = arith.constant 0 : index
    %c0_4 = arith.constant 0 : index
    %4 = vector.load %arg3[%c0_3, %c0_4] : memref<8x1xf32, #tpu.memory_space<vmem>>, vector<8x1xf32>
    %5 = vector.broadcast %4 : vector<8x1xf32> to vector<8x256xf32>
    %6 = arith.addf %3, %5 : vector<8x256xf32>
    %c0_5 = arith.constant 0 : index
    %c0_6 = arith.constant 0 : index
    %7 = vector.load %arg4[%c0_5, %c0_6] : memref<8x256xf32, #tpu.memory_space<vmem>>, vector<8x256xf32>
    tpu.vector_store %arg4[%c0_5, %c0_6], %6 {strides = array<i32>} : memref<8x256xf32, #tpu.memory_space<vmem>>, vector<8x256xf32>,
    return
  }
  func.func @transform_0(%arg0: i32) -> (i32, i32) {
    %c0_i32 = arith.constant 0 : i32
    %c0_i32_0 = arith.constant 0 : i32
    return %arg0, %c0_i32 : i32, i32
  }
  func.func @transform_1(%arg0: i32) -> (i32, i32) {
    %c0_i32 = arith.constant 0 : i32
    %c0_i32_0 = arith.constant 0 : i32
    return %arg0, %c0_i32 : i32, i32
  }
  func.func @transform_2(%arg0: i32) -> (i32, i32) {
    %c0_i32 = arith.constant 0 : i32
    %c0_i32_0 = arith.constant 0 : i32
    return %arg0, %c0_i32 : i32, i32
  }
  func.func @transform_3(%arg0: i32) -> (i32, i32) {
    %c0_i32 = arith.constant 0 : i32
    %c0_i32_0 = arith.constant 0 : i32
    return %arg0, %c0_i32 : i32, i32
  }
}

</mosaic_0001>

<llo_original>
// kernel: tpu_custom_call.1
$region0: #{tpu_custom_call.1}
  #allocation0 [shape = 'u32[]', space=smem, size = 0x4, offset = 0x4, fixed_abs, tag = 'smem constant byte address 0x4 - core index']
  #allocation1 [shape = 'u32[144,128]{1,0:T(1,128)}', space=vmem, size = 0x12000, scoped, tag = 'internal scratch']
  %s0 = inlined_call_operand.vmem [shape: f32[8,256], index: 0, kind: input, shape index: {}]
  %s1 = inlined_call_operand.vmem [shape: f32[8,1], index: 1, kind: input, shape index: {}]
  %s2 = inlined_call_operand.vmem [shape: f32[8,1], index: 2, kind: input, shape index: {}]
  %s3 = inlined_call_operand.hbm [shape: f32[8,256], index: 3, kind: output, shape index: {}]
  %s4 = sld [smem:[#allocation0]]
  $region22: #{tpu_custom_call.1} parent=0
    _
  %s6 = ssub.s32 1, %s4
  %s7 = scalar_select 0, %s6, %s4
  $region1: #{tpu_custom_call.1} parent=0
    #allocation2 [shape = 'u8[8192]{0}', space=vmem, size = 0x2000, scoped, tag = 'output window, operand 0, single buffered']
    #allocation3 [shape = 's32[1]{0}', space=sflag, size = 0x4, scoped, tag = 'scoped memory for tpu_custom_call.1']
    %8 = vsyncpa [#allocation3], 0
    // Predicated region
    $region2: #{tpu_custom_call.1} parent=1 // pred_check
      _
    $region3: #{tpu_custom_call.1} parent=1 // pred_check_branch
      %10 = sbr.rel (0) target = $region5
    $region4: #{tpu_custom_call.1} parent=1 // pred_region
      _
    $region5: #{tpu_custom_call.1} parent=1 // pred_fallthru
      _
    // Predicated region
    $region6: #{tpu_custom_call.1} parent=1 // pred_check
      _
    $region7: #{tpu_custom_call.1} parent=1 // pred_check_branch
      %12 = sbr.rel (0) target = $region9
    $region8: #{tpu_custom_call.1} parent=1 // pred_region
      _
    $region9: #{tpu_custom_call.1} parent=1 // pred_fallthru
      _
    // Predicated region
    $region10: #{tpu_custom_call.1} parent=1 // pred_check
      _
    $region11: #{tpu_custom_call.1} parent=1 // pred_check_branch
      %14 = sbr.rel (0) target = $region13
    $region12: #{tpu_custom_call.1} parent=1 // pred_region
      _
    $region13: #{tpu_custom_call.1} parent=1 // pred_fallthru
      _
    %v15 = vld [vmem:[%s0] sm:$0xff]
    %v16 = vld [vmem:[%s0 + $0x8] sm:$0xff]
    %v17 = vld [vmem:[%s1] sm:$0xff]
    %19 = vset.pattern.permute.xlu0 0
    %20 = vperm.xlu0 %19, %v17
    %v21 = vpop.permute.xlu0 %20
    %v23 = vmul.f32 %v15, %v21
    %v24 = vmul.f32 %v16, %v21
    %v25 = vld [vmem:[%s2] sm:$0xff]
    %27 = vset.pattern.permute.xlu0 0
    %28 = vperm.xlu0 %27, %v25
    %v29 = vpop.permute.xlu0 %28
    %v31 = vadd.f32 %v23, %v29
    %v32 = vadd.f32 %v24, %v29
    %33 = vst [vmem:[#allocation2] sm:$0xff] %v31
    %34 = vst [vmem:[#allocation2 + $0x8] sm:$0xff] %v32
    // Predicated region
    $region14: #{tpu_custom_call.1} parent=1 // pred_check
      _
    $region15: #{tpu_custom_call.1} parent=1 // pred_check_branch
      %36 = sbr.rel (0) target = $region17
    $region16: #{tpu_custom_call.1} parent=1 // pred_region
      %s38 = ssub.s32 256, 256
      %39 = vsyncadd [#allocation3], %s38
      %s41 = sshll.u32 [#allocation2], 4
      %s42 = int_to_ptr.vmem [resolvable:$true] %s41
      %44 = dma.vmem_to_hbm [thread:$0]  %s42, 256, %s3, [#allocation3]
    $region17: #{tpu_custom_call.1} parent=1 // pred_fallthru
      _
    // Predicated region
    $region18: #{tpu_custom_call.1} parent=1 // pred_check
      _
    $region19: #{tpu_custom_call.1} parent=1 // pred_check_branch
      %46 = sbr.rel (0) target = $region21
    $region20: #{tpu_custom_call.1} parent=1 // pred_region
      %47 = dma.done [#allocation3], 256
    $region21: #{tpu_custom_call.1} parent=1 // pred_fallthru
      _
    %48 = vsyncpa [#allocation3], 1

</llo_original>
